<compile_context>
chip_gen: v7x
topology: tpu7x:2x2x1
jax: 0.10.0
libtpu: 0.0.40
codegen_flags: <defaults>
</compile_context>

<pallas_src>
import functools

import jax
import jax.numpy as jnp
from jax.experimental import pallas as pl
from jax.experimental.pallas import tpu as pltpu

_BF16 = jnp.bfloat16
_F32 = jnp.float32
_VMEM_LIMIT = 48 * 1024 * 1024


def _pick_tile(L, cap=256):
    """Largest multiple-of-8 divisor of L that is <= cap (falls back to L)."""
    top = min(cap, L)
    top -= top % 8
    for t in range(top, 7, -8):
        if L % t == 0:
            return t
    # Fallback: untiled along this axis. Fine for small L; for very long
    # divisor-less L this reverts to a whole-sequence block (VMEM risk).
    return L


# ----------------------------------------------------------------------------
# Kernel 1: Q/K/V projection, computed once per (batch, sequence tile)
# ----------------------------------------------------------------------------
def _qkv_proj_kernel(x_ref, wq_ref, wk_ref, wv_ref, bq_ref, bk_ref, bv_ref,
                     q_ref, k_ref, v_ref):
    x = x_ref[0]                                        # (TP, D) bf16
    q_ref[0] = (jnp.dot(x, wq_ref[...], preferred_element_type=_F32)
                + bq_ref[...]).astype(_BF16)
    k_ref[0] = (jnp.dot(x, wk_ref[...], preferred_element_type=_F32)
                + bk_ref[...]).astype(_BF16)
    v_ref[0] = (jnp.dot(x, wv_ref[...], preferred_element_type=_F32)
                + bv_ref[...]).astype(_BF16)


# ----------------------------------------------------------------------------
# Kernel 2: multi-head attention for one (batch, query-tile) grid step
#           (Q/K/V are already projected, bf16 in HBM)
# ----------------------------------------------------------------------------
def _attn_kernel(q_ref, k_ref, v_ref, wo_ref, bo_ref, out_ref, *rest, n_head):
    if len(rest) == 2:
        attn_ref, ctx_scr = rest
    else:
        attn_ref = None
        (ctx_scr,) = rest

    q = q_ref[0]                                        # (TQ, D) bf16 (query tile)
    k = k_ref[0]                                        # (L, D)  bf16 (full seq)
    v = v_ref[0]                                        # (L, D)  bf16 (full seq)
    D = q.shape[1]
    hd = D // n_head
    scale = 1.0 / float(hd) ** 0.5
    # Exact reciprocal when the user-facing attention weights are returned so
    # rows sum to ~1; approximate (EUP slot) reciprocal otherwise.
    approx_recip = attn_ref is None

    for h in range(n_head):
        lo = h * hd
        s = jax.lax.dot_general(q[:, lo:lo + hd], k[:, lo:lo + hd],
                                (((1,), (1,)), ((), ())),
                                preferred_element_type=_F32) * scale   # (TQ, L)
        m = jnp.max(s, axis=-1, keepdims=True)
        p = jnp.exp(s - m)
        denom = jnp.sum(p, axis=-1, keepdims=True)
        p = p * pl.reciprocal(denom, approx=approx_recip)              # softmax

        if attn_ref is not None:
            # Accumulate averaged weights directly in the output ref
            # (no long-lived (TQ, L) register carry).
            pw = p.astype(attn_ref.dtype)
            if h == 0:
                attn_ref[0] = pw
            else:
                attn_ref[0] = attn_ref[0] + pw

        # Per-head context written at its lane offset (no concatenate).
        ctx_scr[:, lo:lo + hd] = jnp.dot(p.astype(_BF16), v[:, lo:lo + hd],
                                         preferred_element_type=_F32)

    if attn_ref is not None:
        attn_ref[0] = attn_ref[0] * (1.0 / n_head)

    out = jnp.dot(ctx_scr[...].astype(_BF16), wo_ref[...],
                  preferred_element_type=_F32) + bo_ref[...]
    out_ref[0] = out.astype(out_ref.dtype)


# ----------------------------------------------------------------------------
# Kernel 3: Conv1d -> ReLU -> Conv1d + residual + LayerNorm, tiled over (B, L)
# ----------------------------------------------------------------------------
def _ffn_kernel(x_hbm, w1_ref, b1_ref, w2_ref, b2_ref, g_ref, be_ref, out_ref,
                xt_scr, sem, *, halo, pad2, L1, eps):
    b = pl.program_id(0)
    t = pl.program_id(1)
    k1 = w1_ref.shape[0]
    k2 = w2_ref.shape[0]
    d_hid = w1_ref.shape[2]
    TL = out_ref.shape[1]
    n_rows = xt_scr.shape[0]                            # TL + 2*halo

    # Fetch only this tile's halo'd input rows (wrapper pre-padded `halo` zero
    # rows on each side of the sequence, so the HBM slice starts at t*TL).
    cp = pltpu.make_async_copy(x_hbm.at[b, pl.ds(t * TL, n_rows), :], xt_scr, sem)
    cp.start()
    cp.wait()

    # conv1 as per-tap matmuls over the rows this tile's conv2 needs.
    L1_t = TL + k2 - 1
    h = jnp.zeros((L1_t, d_hid), _F32)
    for tap in range(k1):
        h = h + jnp.dot(xt_scr[tap:tap + L1_t, :], w1_ref[tap],
                        preferred_element_type=_F32)
    h = jnp.maximum(h + b1_ref[...], 0.0)               # bias + ReLU (f32)

    if pad2 > 0:
        # Rows that fall in conv2's zero padding (outside conv1's true output
        # range) must be exactly zero.
        j = t * TL - pad2 + jax.lax.broadcasted_iota(jnp.int32, (L1_t, 1), 0)
        h = jnp.where((j >= 0) & (j < L1), h, 0.0)

    h_b = h.astype(_BF16)

    # conv2 as per-tap matmuls.
    y = jnp.zeros((TL, w2_ref.shape[2]), _F32)
    for tap in range(k2):
        y = y + jnp.dot(h_b[tap:tap + TL, :], w2_ref[tap],
                        preferred_element_type=_F32)
    y = y + b2_ref[...]

    # dropout is identity at inference; residual + LayerNorm in f32.
    resid = xt_scr[halo:halo + TL, :].astype(_F32)
    z = y + resid
    mu = jnp.mean(z, axis=-1, keepdims=True)
    var = jnp.mean((z - mu) ** 2, axis=-1, keepdims=True)
    zn = (z - mu) * jax.lax.rsqrt(var + eps)
    out_ref[0] = (zn * g_ref[...] + be_ref[...]).astype(out_ref.dtype)


# ----------------------------------------------------------------------------
# Wrappers
# ----------------------------------------------------------------------------
def prepare_fft_block_params(p):
    """One-time weight prep (transpose / cast). Call once at init, not per step."""
    return dict(
        wq_t=p["wq"].T.astype(_BF16), wk_t=p["wk"].T.astype(_BF16),
        wv_t=p["wv"].T.astype(_BF16),
        bq=p["bq"].astype(_F32), bk=p["bk"].astype(_F32), bv=p["bv"].astype(_F32),
        wo_t=p["wo"].T.astype(_BF16), bo=p["bo"].astype(_F32),
        w1=p["w1"].astype(_BF16), b1=p["b1"].astype(_F32),
        w2=p["w2"].astype(_BF16), b2=p["b2"].astype(_F32),
        ln_g=p["ln_g"].astype(_F32), ln_b=p["ln_b"].astype(_F32),
    )


def multihead_self_attention(x, prep, n_head, *, q_tile=None, need_weights=True,
                             attn_dtype=_F32):
    B, L, D = x.shape
    assert D % n_head == 0, "d_model must be divisible by n_head"
    TP = _pick_tile(L, cap=512)
    TQ = _pick_tile(L, cap=256) if q_tile is None else q_tile
    assert L % TQ == 0 and L % TP == 0

    x_b = x.astype(_BF16)

    # --- Kernel 1: Q/K/V projection, once per (batch, sequence tile) -------
    q, k, v = pl.pallas_call(
        _qkv_proj_kernel,
        grid=(B, L // TP),
        in_specs=[
            pl.BlockSpec((1, TP, D), lambda b, t: (b, t, 0)),
            pl.BlockSpec((D, D), lambda b, t: (0, 0)),
            pl.BlockSpec((D, D), lambda b, t: (0, 0)),
            pl.BlockSpec((D, D), lambda b, t: (0, 0)),
            pl.BlockSpec((1, D), lambda b, t: (0, 0)),
            pl.BlockSpec((1, D), lambda b, t: (0, 0)),
            pl.BlockSpec((1, D), lambda b, t: (0, 0)),
        ],
        out_specs=[pl.BlockSpec((1, TP, D), lambda b, t: (b, t, 0))] * 3,
        out_shape=[jax.ShapeDtypeStruct((B, L, D), _BF16)] * 3,
        compiler_params=pltpu.CompilerParams(
            dimension_semantics=("parallel", "parallel"),
            vmem_limit_bytes=_VMEM_LIMIT),
    )(x_b, prep["wq_t"], prep["wk_t"], prep["wv_t"],
      prep["bq"], prep["bk"], prep["bv"])

    # --- Kernel 2: attention per (batch, query tile) ------------------------
    kernel = functools.partial(_attn_kernel, n_head=n_head)
    in_specs = [
        pl.BlockSpec((1, TQ, D), lambda b, qi: (b, qi, 0)),   # Q tile
        pl.BlockSpec((1, L, D), lambda b, qi: (b, 0, 0)),     # full K (resident across qi)
        pl.BlockSpec((1, L, D), lambda b, qi: (b, 0, 0)),     # full V (resident across qi)
        pl.BlockSpec((D, D), lambda b, qi: (0, 0)),
        pl.BlockSpec((1, D), lambda b, qi: (0, 0)),
    ]
    out_spec_o = pl.BlockSpec((1, TQ, D), lambda b, qi: (b, qi, 0))
    out_shape_o = jax.ShapeDtypeStruct((B, L, D), _BF16)
    if need_weights:
        out_specs = [out_spec_o, pl.BlockSpec((1, TQ, L), lambda b, qi: (b, qi, 0))]
        out_shape = [out_shape_o, jax.ShapeDtypeStruct((B, L, L), attn_dtype)]
    else:
        out_specs = [out_spec_o]
        out_shape = [out_shape_o]

    result = pl.pallas_call(
        kernel,
        grid=(B, L // TQ),
        in_specs=in_specs,
        out_specs=out_specs,
        out_shape=out_shape,
        scratch_shapes=[pltpu.VMEM((TQ, D), _F32)],   # per-head context slab
        compiler_params=pltpu.CompilerParams(
            dimension_semantics=("parallel", "parallel"),
            vmem_limit_bytes=_VMEM_LIMIT),
    )(q, k, v, prep["wo_t"], prep["bo"])

    if need_weights:
        return result[0], result[1]
    return result[0], None


def positionwise_ffn(x, prep, paddings, *, seq_tile=None, out_dtype=_F32, eps=1e-5):
    B, L, D = x.shape
    w1, b1, w2, b2 = prep["w1"], prep["b1"], prep["w2"], prep["b2"]
    k1, _, d_hid = w1.shape
    k2 = w2.shape[0]
    p1, p2 = paddings
    L1 = L + 2 * p1 - (k1 - 1)
    assert L1 + 2 * p2 - (k2 - 1) == L, "conv padding must preserve seq length"
    halo = p1 + p2   # composite receptive-field halo on each side

    TL = _pick_tile(L, cap=256) if seq_tile is None else seq_tile
    assert L % TL == 0

    x_b = x.astype(_BF16)
    if halo > 0:
        x_b = jnp.pad(x_b, ((0, 0), (halo, halo), (0, 0)))

    kernel = functools.partial(_ffn_kernel, halo=halo, pad2=p2, L1=L1, eps=eps)

    return pl.pallas_call(
        kernel,
        grid=(B, L // TL),
        in_specs=[
            pl.BlockSpec(memory_space=pl.ANY),                    # padded act stays in HBM
            pl.BlockSpec((k1, D, d_hid), lambda b, t: (0, 0, 0)),
            pl.BlockSpec((1, d_hid), lambda b, t: (0, 0)),
            pl.BlockSpec((k2, d_hid, D), lambda b, t: (0, 0, 0)),
            pl.BlockSpec((1, D), lambda b, t: (0, 0)),
            pl.BlockSpec((1, D), lambda b, t: (0, 0)),
            pl.BlockSpec((1, D), lambda b, t: (0, 0)),
        ],
        out_specs=pl.BlockSpec((1, TL, D), lambda b, t: (b, t, 0)),
        out_shape=jax.ShapeDtypeStruct((B, L, D), out_dtype),
        scratch_shapes=[
            pltpu.VMEM((TL + 2 * halo, D), _BF16),   # halo'd input tile
            pltpu.SemaphoreType.DMA,
        ],
        compiler_params=pltpu.CompilerParams(
            dimension_semantics=("parallel", "parallel"),
            vmem_limit_bytes=_VMEM_LIMIT),
    )(x_b, w1, b1, w2, b2, prep["ln_g"], prep["ln_b"])


def fft_block_forward(prep, enc_input, n_head, fft_conv1d_padding,
                      non_pad_mask=None, slf_attn_mask=None, need_weights=True,
                      out_dtype=_F32):
    """Equivalent of FFTBlock.forward (eval mode). `prep` from prepare_fft_block_params."""
    # TODO(synk): slf_attn_mask (attention mask) is not plumbed into the attention kernel.
    assert slf_attn_mask is None

    enc_output, enc_slf_attn = multihead_self_attention(
        enc_input, prep, n_head, need_weights=need_weights)

    if non_pad_mask is not None:
        enc_output = (enc_output * non_pad_mask).astype(_BF16)

    enc_output = positionwise_ffn(enc_output, prep, fft_conv1d_padding,
                                  out_dtype=out_dtype)

    if non_pad_mask is not None:
        enc_output = enc_output * non_pad_mask

    return enc_output, enc_slf_attn


# ----------------------------------------------------------------------------
# Pure-JAX reference (mirrors the kernel's bf16-at-MXU-inputs precision policy)
# ----------------------------------------------------------------------------
def reference_forward(params, x, n_head, paddings, mxu_dtype=_BF16):
    def mm(a, b):
        return jnp.dot(a.astype(mxu_dtype), b.astype(mxu_dtype),
                       preferred_element_type=_F32)

    B, L, D = x.shape
    hd = D // n_head
    xc = x.astype(mxu_dtype).astype(_F32)
    q = mm(xc, params["wq"].T) + params["bq"]
    k = mm(xc, params["wk"].T) + params["bk"]
    v = mm(xc, params["wv"].T) + params["bv"]
    qh = q.reshape(B, L, n_head, hd).transpose(0, 2, 1, 3)
    kh = k.reshape(B, L, n_head, hd).transpose(0, 2, 1, 3)
    vh = v.reshape(B, L, n_head, hd).transpose(0, 2, 1, 3)
    s = jnp.einsum("bhqd,bhkd->bhqk", qh.astype(mxu_dtype), kh.astype(mxu_dtype),
                   preferred_element_type=_F32) / jnp.sqrt(float(hd))
    p = jax.nn.softmax(s, axis=-1)
    ctx = jnp.einsum("bhqk,bhkd->bhqd", p.astype(mxu_dtype), vh.astype(mxu_dtype),
                     preferred_element_type=_F32).transpose(0, 2, 1, 3).reshape(B, L, D)
    attn_out = mm(ctx, params["wo"].T) + params["bo"]
    attn_w = p.mean(axis=1)

    a = attn_out.astype(mxu_dtype).astype(_F32)   # attention output is stored bf16

    p1, p2 = paddings
    w1, w2 = params["w1"], params["w2"]
    k1, _, d_hid = w1.shape
    k2 = w2.shape[0]
    xpad = jnp.pad(a, ((0, 0), (p1, p1), (0, 0)))
    L1 = L + 2 * p1 - (k1 - 1)
    h = sum(jnp.einsum("bld,dh->blh", xpad[:, j:j + L1, :].astype(mxu_dtype),
                       w1[j].astype(mxu_dtype), preferred_element_type=_F32)
            for j in range(k1))
    h = jnp.maximum(h + params["b1"], 0.0).astype(mxu_dtype).astype(_F32)
    hp = jnp.pad(h, ((0, 0), (p2, p2), (0, 0)))
    y = sum(jnp.einsum("blh,hd->bld", hp[:, j:j + L, :].astype(mxu_dtype),
                       w2[j].astype(mxu_dtype), preferred_element_type=_F32)
            for j in range(k2))
    y = y + params["b2"]
    z = y + a
    mu = jnp.mean(z, axis=-1, keepdims=True)
    var = jnp.mean((z - mu) ** 2, axis=-1, keepdims=True)
    zn = (z - mu) * jax.lax.rsqrt(var + 1e-5)
    return zn * params["ln_g"] + params["ln_b"], attn_w


# ----------------------------------------------------------------------------
if __name__ == "__main__":
    key = jax.random.PRNGKey(0)
    B, L = 2, 8
    d_model, d_inner, n_head = 32, 64, 2
    # FFTBlock calls MHA with key=value=enc_input, so d_k = d_v = d_model.
    fft_conv1d_kernel = (3, 1)
    fft_conv1d_padding = (1, 0)

    keys = jax.random.split(key, 16)

    def init(k, shape, scale=0.1):
        return jax.random.normal(k, shape, _F32) * scale

    params = dict(
        wq=init(keys[0], (d_model, d_model)),
        wk=init(keys[1], (d_model, d_model)),
        wv=init(keys[2], (d_model, d_model)),
        bq=init(keys[3], (1, d_model)),
        bk=init(keys[4], (1, d_model)),
        bv=init(keys[5], (1, d_model)),
        wo=init(keys[6], (d_model, d_model)),
        bo=init(keys[7], (1, d_model)),
        # conv weights stored as (kernel_tap, C_in, C_out)
        w1=init(keys[8], (fft_conv1d_kernel[0], d_model, d_inner)),
        b1=init(keys[9], (1, d_inner)),
        w2=init(keys[10], (fft_conv1d_kernel[1], d_inner, d_model)),
        b2=init(keys[11], (1, d_model)),
        ln_g=jnp.ones((1, d_model), _F32),
        ln_b=jnp.zeros((1, d_model), _F32),
    )

    enc_input = jax.random.normal(keys[12], (B, L, d_model), _F32)

    prep = prepare_fft_block_params(params)   # one-time weight prep
    out, attn = fft_block_forward(prep, enc_input, n_head, fft_conv1d_padding,
                                  non_pad_mask=None, slf_attn_mask=None)
    out = jax.block_until_ready(out)
    attn = jax.block_until_ready(attn)

    ref_out, ref_attn = reference_forward(params, enc_input, n_head, fft_conv1d_padding)
    assert out.shape == (B, L, d_model) and attn.shape == (B, L, L)
    # Tolerances account for f32-vs-bf16 rounding-order differences.
    assert bool(jnp.allclose(out, ref_out, atol=2e-2, rtol=2e-2))
    assert bool(jnp.allclose(attn, ref_attn, atol=1e-2, rtol=1e-2))

    print("KERNEL_OK")
</pallas_src>

<mosaic_0001>
module attributes {stable_mosaic.version = 11 : i64} {
  func.func @_qkv_proj_kernel(%arg0: i32, %arg1: i32, %arg2: memref<1x8x32xbf16, #tpu.memory_space<vmem>>, %arg3: memref<32x32xbf16, #tpu.memory_space<vmem>>, %arg4: memref<32x32xbf16, #tpu.memory_space<vmem>>, %arg5: memref<32x32xbf16, #tpu.memory_space<vmem>>, %arg6: memref<1x32xf32, #tpu.memory_space<vmem>>, %arg7: memref<1x32xf32, #tpu.memory_space<vmem>>, %arg8: memref<1x32xf32, #tpu.memory_space<vmem>>, %arg9: memref<1x8x32xbf16, #tpu.memory_space<vmem>>, %arg10: memref<1x8x32xbf16, #tpu.memory_space<vmem>>, %arg11: memref<1x8x32xbf16, #tpu.memory_space<vmem>>) attributes {dimension_semantics = [#tpu.dimension_semantics<parallel>, #tpu.dimension_semantics<parallel>], iteration_bounds = array<i64: 2, 1>, scalar_prefetch = 0 : i64, scratch_operands = 0 : i64, tpu.core_type = #tpu.core_type<tc>, window_params = [{transform_indices = @transform_0, window_bounds = array<i64: 1, 8, 32>}, {pipeline_mode = #tpu.pipeline_mode<synchronous>, transform_indices = @transform_1, window_bounds = array<i64: 32, 32>}, {pipeline_mode = #tpu.pipeline_mode<synchronous>, transform_indices = @transform_2, window_bounds = array<i64: 32, 32>}, {pipeline_mode = #tpu.pipeline_mode<synchronous>, transform_indices = @transform_3, window_bounds = array<i64: 32, 32>}, {pipeline_mode = #tpu.pipeline_mode<synchronous>, transform_indices = @transform_4, window_bounds = array<i64: 1, 32>}, {pipeline_mode = #tpu.pipeline_mode<synchronous>, transform_indices = @transform_5, window_bounds = array<i64: 1, 32>}, {pipeline_mode = #tpu.pipeline_mode<synchronous>, transform_indices = @transform_6, window_bounds = array<i64: 1, 32>}, {transform_indices = @transform_7, window_bounds = array<i64: 1, 8, 32>}, {transform_indices = @transform_8, window_bounds = array<i64: 1, 8, 32>}, {transform_indices = @transform_9, window_bounds = array<i64: 1, 8, 32>}]} {
    %c0 = arith.constant 0 : index
    %c0_0 = arith.constant 0 : index
    %c0_1 = arith.constant 0 : index
    %0 = vector.load %arg2[%c0, %c0_0, %c0_1] : memref<1x8x32xbf16, #tpu.memory_space<vmem>>, vector<1x8x32xbf16>
    %1 = vector.shape_cast %0 : vector<1x8x32xbf16> to vector<8x32xbf16>
    %c0_2 = arith.constant 0 : index
    %c0_3 = arith.constant 0 : index
    %2 = vector.load %arg3[%c0_2, %c0_3] : memref<32x32xbf16, #tpu.memory_space<vmem>>, vector<32x32xbf16>
    %cst = arith.constant dense<0.000000e+00> : vector<8x32xf32>
    %3 = tpu.matmul %1, %2, %cst {dimension_numbers = #tpu.dot_dimension_numbers<[1], [0], [0], [1], [0, 0, 1, 1], [], []>} : vector<8x32xbf16>, vector<32x32xbf16>, vector<8x32xf32> -> vector<8x32xf32>
    %c0_4 = arith.constant 0 : index
    %c0_5 = arith.constant 0 : index
    %4 = vector.load %arg6[%c0_4, %c0_5] : memref<1x32xf32, #tpu.memory_space<vmem>>, vector<1x32xf32>
    %5 = vector.broadcast %4 : vector<1x32xf32> to vector<8x32xf32>
    %6 = arith.addf %3, %5 : vector<8x32xf32>
    %7 = arith.truncf %6 : vector<8x32xf32> to vector<8x32xbf16>
    %c0_6 = arith.constant 0 : index
    %c0_7 = arith.constant 0 : index
    %c0_8 = arith.constant 0 : index
    %8 = vector.load %arg9[%c0_6, %c0_7, %c0_8] : memref<1x8x32xbf16, #tpu.memory_space<vmem>>, vector<1x8x32xbf16>
    %9 = vector.shape_cast %8 : vector<1x8x32xbf16> to vector<8x32xbf16>
    %10 = vector.shape_cast %7 : vector<8x32xbf16> to vector<1x8x32xbf16>
    tpu.vector_store %arg9[%c0_6, %c0_7, %c0_8], %10 {strides = array<i32>} : memref<1x8x32xbf16, #tpu.memory_space<vmem>>, vector<1x8x32xbf16>,
    %c0_9 = arith.constant 0 : index
    %c0_10 = arith.constant 0 : index
    %11 = vector.load %arg4[%c0_9, %c0_10] : memref<32x32xbf16, #tpu.memory_space<vmem>>, vector<32x32xbf16>
    %cst_11 = arith.constant dense<0.000000e+00> : vector<8x32xf32>
    %12 = tpu.matmul %1, %11, %cst_11 {dimension_numbers = #tpu.dot_dimension_numbers<[1], [0], [0], [1], [0, 0, 1, 1], [], []>} : vector<8x32xbf16>, vector<32x32xbf16>, vector<8x32xf32> -> vector<8x32xf32>
    %c0_12 = arith.constant 0 : index
    %c0_13 = arith.constant 0 : index
    %13 = vector.load %arg7[%c0_12, %c0_13] : memref<1x32xf32, #tpu.memory_space<vmem>>, vector<1x32xf32>
    %14 = vector.broadcast %13 : vector<1x32xf32> to vector<8x32xf32>
    %15 = arith.addf %12, %14 : vector<8x32xf32>
    %16 = arith.truncf %15 : vector<8x32xf32> to vector<8x32xbf16>
    %c0_14 = arith.constant 0 : index
    %c0_15 = arith.constant 0 : index
    %c0_16 = arith.constant 0 : index
    %17 = vector.load %arg10[%c0_14, %c0_15, %c0_16] : memref<1x8x32xbf16, #tpu.memory_space<vmem>>, vector<1x8x32xbf16>
    %18 = vector.shape_cast %17 : vector<1x8x32xbf16> to vector<8x32xbf16>
    %19 = vector.shape_cast %16 : vector<8x32xbf16> to vector<1x8x32xbf16>
    tpu.vector_store %arg10[%c0_14, %c0_15, %c0_16], %19 {strides = array<i32>} : memref<1x8x32xbf16, #tpu.memory_space<vmem>>, vector<1x8x32xbf16>,
    %c0_17 = arith.constant 0 : index
    %c0_18 = arith.constant 0 : index
    %20 = vector.load %arg5[%c0_17, %c0_18] : memref<32x32xbf16, #tpu.memory_space<vmem>>, vector<32x32xbf16>
    %cst_19 = arith.constant dense<0.000000e+00> : vector<8x32xf32>
    %21 = tpu.matmul %1, %20, %cst_19 {dimension_numbers = #tpu.dot_dimension_numbers<[1], [0], [0], [1], [0, 0, 1, 1], [], []>} : vector<8x32xbf16>, vector<32x32xbf16>, vector<8x32xf32> -> vector<8x32xf32>
    %c0_20 = arith.constant 0 : index
    %c0_21 = arith.constant 0 : index
    %22 = vector.load %arg8[%c0_20, %c0_21] : memref<1x32xf32, #tpu.memory_space<vmem>>, vector<1x32xf32>
    %23 = vector.broadcast %22 : vector<1x32xf32> to vector<8x32xf32>
    %24 = arith.addf %21, %23 : vector<8x32xf32>
    %25 = arith.truncf %24 : vector<8x32xf32> to vector<8x32xbf16>
    %c0_22 = arith.constant 0 : index
    %c0_23 = arith.constant 0 : index
    %c0_24 = arith.constant 0 : index
    %26 = vector.load %arg11[%c0_22, %c0_23, %c0_24] : memref<1x8x32xbf16, #tpu.memory_space<vmem>>, vector<1x8x32xbf16>
    %27 = vector.shape_cast %26 : vector<1x8x32xbf16> to vector<8x32xbf16>
    %28 = vector.shape_cast %25 : vector<8x32xbf16> to vector<1x8x32xbf16>
    tpu.vector_store %arg11[%c0_22, %c0_23, %c0_24], %28 {strides = array<i32>} : memref<1x8x32xbf16, #tpu.memory_space<vmem>>, vector<1x8x32xbf16>,
    return
  }
  func.func @transform_0(%arg0: i32, %arg1: i32) -> (i32, i32, i32) {
    %c0_i32 = arith.constant 0 : i32
    %c0_i32_0 = arith.constant 0 : i32
    return %arg0, %arg1, %c0_i32 : i32, i32, i32
  }
  func.func @transform_1(%arg0: i32, %arg1: i32) -> (i32, i32) {
    %c0_i32 = arith.constant 0 : i32
    %c0_i32_0 = arith.constant 0 : i32
    %c0_i32_1 = arith.constant 0 : i32
    return %c0_i32, %c0_i32_0 : i32, i32
  }
  func.func @transform_2(%arg0: i32, %arg1: i32) -> (i32, i32) {
    %c0_i32 = arith.constant 0 : i32
    %c0_i32_0 = arith.constant 0 : i32
    %c0_i32_1 = arith.constant 0 : i32
    return %c0_i32, %c0_i32_0 : i32, i32
  }
  func.func @transform_3(%arg0: i32, %arg1: i32) -> (i32, i32) {
    %c0_i32 = arith.constant 0 : i32
    %c0_i32_0 = arith.constant 0 : i32
    %c0_i32_1 = arith.constant 0 : i32
    return %c0_i32, %c0_i32_0 : i32, i32
  }
  func.func @transform_4(%arg0: i32, %arg1: i32) -> (i32, i32) {
    %c0_i32 = arith.constant 0 : i32
    %c0_i32_0 = arith.constant 0 : i32
    %c0_i32_1 = arith.constant 0 : i32
    return %c0_i32, %c0_i32_0 : i32, i32
  }
  func.func @transform_5(%arg0: i32, %arg1: i32) -> (i32, i32) {
    %c0_i32 = arith.constant 0 : i32
    %c0_i32_0 = arith.constant 0 : i32
    %c0_i32_1 = arith.constant 0 : i32
    return %c0_i32, %c0_i32_0 : i32, i32
  }
  func.func @transform_6(%arg0: i32, %arg1: i32) -> (i32, i32) {
    %c0_i32 = arith.constant 0 : i32
    %c0_i32_0 = arith.constant 0 : i32
    %c0_i32_1 = arith.constant 0 : i32
    return %c0_i32, %c0_i32_0 : i32, i32
  }
  func.func @transform_7(%arg0: i32, %arg1: i32) -> (i32, i32, i32) {
    %c0_i32 = arith.constant 0 : i32
    %c0_i32_0 = arith.constant 0 : i32
    return %arg0, %arg1, %c0_i32 : i32, i32, i32
  }
  func.func @transform_8(%arg0: i32, %arg1: i32) -> (i32, i32, i32) {
    %c0_i32 = arith.constant 0 : i32
    %c0_i32_0 = arith.constant 0 : i32
    return %arg0, %arg1, %c0_i32 : i32, i32, i32
  }
  func.func @transform_9(%arg0: i32, %arg1: i32) -> (i32, i32, i32) {
    %c0_i32 = arith.constant 0 : i32
    %c0_i32_0 = arith.constant 0 : i32
    return %arg0, %arg1, %c0_i32 : i32, i32, i32
  }
}

</mosaic_0001>

<llo_original>
// kernel: tpu_custom_call.1
$region0: #{tpu_custom_call.1}
  #allocation0 [shape = 'u32[]', space=smem, size = 0x4, offset = 0x4, fixed_abs, tag = 'smem constant byte address 0x4 - core index']
  #allocation1 [shape = 'u32[144,128]{1,0:T(1,128)}', space=vmem, size = 0x12000, scoped, tag = 'internal scratch']
  %s0 = inlined_call_operand.hbm [shape: bf16[2,8,32], index: 0, kind: input, shape index: {}]
  %s1 = inlined_call_operand.hbm [shape: bf16[32,32], index: 1, kind: input, shape index: {}]
  %s2 = inlined_call_operand.hbm [shape: bf16[32,32], index: 2, kind: input, shape index: {}]
  %s3 = inlined_call_operand.hbm [shape: bf16[32,32], index: 3, kind: input, shape index: {}]
  %s4 = inlined_call_operand.vmem [shape: f32[1,32], index: 4, kind: input, shape index: {}]
  %s5 = inlined_call_operand.vmem [shape: f32[1,32], index: 5, kind: input, shape index: {}]
  %s6 = inlined_call_operand.vmem [shape: f32[1,32], index: 6, kind: input, shape index: {}]
  %s7 = inlined_call_operand.hbm [shape: bf16[2,8,32], index: 7, kind: output, shape index: {0}]
  %s8 = inlined_call_operand.hbm [shape: bf16[2,8,32], index: 8, kind: output, shape index: {1}]
  %s9 = inlined_call_operand.hbm [shape: bf16[2,8,32], index: 9, kind: output, shape index: {2}]
  %10 = xla_tuple %s7, %s8, %s9
  %s11 = sld [smem:[#allocation0]]
  $region93: #{tpu_custom_call.1} parent=0
    _
  %s13 = ssub.s32 1, %s11
  %s14 = scalar_select 0, %s13, %s11
  $region1: #{tpu_custom_call.1} parent=0
    #allocation2 [shape = 'u8[4096]{0}', space=vmem, size = 0x1000, scoped, tag = 'input window, operand 0']
    #allocation3 [shape = 's32[2]{0}', space=sflag, size = 0x8, scoped, tag = 'scoped memory for tpu_custom_call.1']
    #allocation4 [shape = 's32[2]{0}', space=sflag, size = 0x8, scoped, tag = 'scoped memory for tpu_custom_call.1']
    #allocation5 [shape = 'u8[8192]{0}', space=vmem, size = 0x2000, scoped, tag = 'input window, operand 1, single buffered']
    #allocation6 [shape = 's32[1]{0}', space=sflag, size = 0x4, scoped, tag = 'scoped memory for tpu_custom_call.1']
    #allocation7 [shape = 'u8[8192]{0}', space=vmem, size = 0x2000, scoped, tag = 'input window, operand 2, single buffered']
    #allocation8 [shape = 'u8[8192]{0}', space=vmem, size = 0x2000, scoped, tag = 'input window, operand 3, single buffered']
    #allocation9 [shape = 's32[1]{0}', space=sflag, size = 0x4, scoped, tag = 'scoped memory for tpu_custom_call.1']
    #allocation10 [shape = 'u8[4096]{0}', space=vmem, size = 0x1000, scoped, tag = 'output window, operand 0']
    #allocation11 [shape = 'u8[4096]{0}', space=vmem, size = 0x1000, scoped, tag = 'output window, operand 1']
    #allocation12 [shape = 's32[2]{0}', space=sflag, size = 0x8, scoped, tag = 'scoped memory for tpu_custom_call.1']
    #allocation13 [shape = 'u8[4096]{0}', space=vmem, size = 0x1000, scoped, tag = 'output window, operand 2']
    %15 = vsyncpa [#allocation3], 0
    %s16 = scalar_lea.sflag [#allocation3], 1
    %17 = vsyncpa %s16, 0
    %18 = vsyncpa [#allocation6], 0
    %19 = vsyncpa [#allocation9], 0
    %20 = vsyncpa [#allocation4], 0
    %s21 = scalar_lea.sflag [#allocation4], 1
    %22 = vsyncpa %s21, 0
    %23 = vsyncpa [#allocation12], 0
    %s24 = scalar_lea.sflag [#allocation12], 1
    %25 = vsyncpa %s24, 0
    loop: start=0, step=1, limit=4
    $region2: #{tpu_custom_call.1} parent=1 // loop_pre_header
      _
    $region3: #{tpu_custom_call.1} parent=1 // loop_header
      %s27 = sphi 0, %s31
      %p28 = scmp.ge.s32.totalorder %s27, 4
      %s34 = sphi 0, %s46
      %s35 = sphi 0, %s42
      %s36 = sphi 0, %s34
      %s37 = sphi 0, %s35
      %s38 = sphi 0, %s36
      %s39 = sphi 0, %s37
      %s51 = sphi 0, %s53
      %s54 = sphi 0, %s51
      %s55 = sphi 0, %s54
      %s71 = sphi 0, %s55
      %s75 = sphi 0, %s75
      %s77 = sphi 0, %s75
      %s78 = sphi 0, %s77
      %s92 = sphi 0, %s78
      %s96 = sphi 0, %s96
      %s98 = sphi 0, %s96
      %s99 = sphi 0, %s98
      %s113 = sphi 0, %s99
      %s117 = sphi 0, %s117
      %s119 = sphi 0, %s117
      %s120 = sphi 0, %s119
      %s134 = sphi 0, %s120
      %s138 = sphi 0, %s138
      %s140 = sphi 0, %s138
      %s141 = sphi 0, %s140
      %s155 = sphi 0, %s141
      %s159 = sphi 0, %s159
      %s161 = sphi 0, %s159
      %s162 = sphi 0, %s161
      %s176 = sphi 0, %s162
      %s180 = sphi 0, %s180
      %s182 = sphi 0, %s180
      %s183 = sphi 0, %s182
      %s197 = sphi 0, %s183
      %s205 = sphi 0, %s207
      %s208 = sphi 0, %s205
      %s209 = sphi 0, %s208
      %s225 = sphi 0, %s209
      %s233 = sphi 0, %s235
      %s236 = sphi 0, %s233
      %s237 = sphi 0, %s236
      %s253 = sphi 0, %s237
      %s261 = sphi 0, %s263
      %s264 = sphi 0, %s261
      %s265 = sphi 0, %s264
      %s281 = sphi 0, %s265
    $region4: #{tpu_custom_call.1} parent=1 // loop_header_branch
      %30 = sbr.rel (%p28) target = $region8
    $region5: #{tpu_custom_call.1} parent=1 // loop_body
      %s32 = ssub.s32 %s27, 1
      %s33 = ssub.s32 %s27, 2
      %s40 = sadd.s32 1, %s35
      %p41 = scmp.ge.s32.totalorder %s40, 1
      %s42 = scalar_select %p41, 0, %s40
      %s43 = sadd.s32 1, %s34
      %s44 = scalar_select %p41, %s43, %s34
      %p45 = scmp.ge.s32.totalorder %s44, 2
      %s46 = scalar_select %p45, 0, %s44
      %s47 = ssub.s32 %s34, %s46
      %s48 = ssub.s32 %s35, %s42
      %s49 = sor.u32 %s47, %s48
      %p50 = scmp.eq.s32.totalorder %s49, 0
      %s52 = sadd.s32 %s51, 1
      %s53 = scalar_select %p50, %s51, %s52
      %p56 = pneg %p50
      %p57 = scmp.eq.s32.totalorder %s27, 1
      %p58 = por %p56, %p57
      %p59 = scmp.ne.s32.totalorder %s51, %s54
      %p60 = scmp.eq.s32.totalorder %s27, 0
      %p61 = por %p59, %p60
      %p62 = scmp.ne.s32.totalorder %s51, %s54
      %p63 = scmp.eq.s32.totalorder %s32, 1
      %p64 = por %p62, %p63
      %p65 = scmp.ne.s32.totalorder %s54, %s55
      %p66 = scmp.eq.s32.totalorder %s32, 0
      %p67 = por %p65, %p66
      %p68 = scmp.ne.s32.totalorder %s54, %s55
      %p69 = scmp.eq.s32.totalorder %s33, 1
      %p70 = por %p68, %p69
      %p72 = scmp.ne.s32.totalorder %s55, %s71
      %p73 = scmp.eq.s32.totalorder %s33, 0
      %p74 = por %p72, %p73
      %s76 = sadd.s32 %s75, 1
      %p79 = scmp.eq.s32.totalorder %s27, 1
      %p80 = scmp.ne.s32.totalorder %s75, %s77
      %p81 = scmp.eq.s32.totalorder %s27, 0
      %p82 = por %p80, %p81
      %p83 = scmp.ne.s32.totalorder %s75, %s77
      %p84 = scmp.eq.s32.totalorder %s32, 1
      %p85 = por %p83, %p84
      %p86 = scmp.ne.s32.totalorder %s77, %s78
      %p87 = scmp.eq.s32.totalorder %s32, 0
      %p88 = por %p86, %p87
      %p89 = scmp.ne.s32.totalorder %s77, %s78
      %p90 = scmp.eq.s32.totalorder %s33, 1
      %p91 = por %p89, %p90
      %p93 = scmp.ne.s32.totalorder %s78, %s92
      %p94 = scmp.eq.s32.totalorder %s33, 0
      %p95 = por %p93, %p94
      %s97 = sadd.s32 %s96, 1
      %p100 = scmp.eq.s32.totalorder %s27, 1
      %p101 = scmp.ne.s32.totalorder %s96, %s98
      %p102 = scmp.eq.s32.totalorder %s27, 0
      %p103 = por %p101, %p102
      %p104 = scmp.ne.s32.totalorder %s96, %s98
      %p105 = scmp.eq.s32.totalorder %s32, 1
      %p106 = por %p104, %p105
      %p107 = scmp.ne.s32.totalorder %s98, %s99
      %p108 = scmp.eq.s32.totalorder %s32, 0
      %p109 = por %p107, %p108
      %p110 = scmp.ne.s32.totalorder %s98, %s99
      %p111 = scmp.eq.s32.totalorder %s33, 1
      %p112 = por %p110, %p111
      %p114 = scmp.ne.s32.totalorder %s99, %s113
      %p115 = scmp.eq.s32.totalorder %s33, 0
      %p116 = por %p114, %p115
      %s118 = sadd.s32 %s117, 1
      %p121 = scmp.eq.s32.totalorder %s27, 1
      %p122 = scmp.ne.s32.totalorder %s117, %s119
      %p123 = scmp.eq.s32.totalorder %s27, 0
      %p124 = por %p122, %p123
      %p125 = scmp.ne.s32.totalorder %s117, %s119
      %p126 = scmp.eq.s32.totalorder %s32, 1
      %p127 = por %p125, %p126
      %p128 = scmp.ne.s32.totalorder %s119, %s120
      %p129 = scmp.eq.s32.totalorder %s32, 0
      %p130 = por %p128, %p129
      %p131 = scmp.ne.s32.totalorder %s119, %s120
      %p132 = scmp.eq.s32.totalorder %s33, 1
      %p133 = por %p131, %p132
      %p135 = scmp.ne.s32.totalorder %s120, %s134
      %p136 = scmp.eq.s32.totalorder %s33, 0
      %p137 = por %p135, %p136
      %s139 = sadd.s32 %s138, 1
      %p142 = scmp.eq.s32.totalorder %s27, 1
      %p143 = scmp.ne.s32.totalorder %s138, %s140
      %p144 = scmp.eq.s32.totalorder %s27, 0
      %p145 = por %p143, %p144
      %p146 = scmp.ne.s32.totalorder %s138, %s140
      %p147 = scmp.eq.s32.totalorder %s32, 1
      %p148 = por %p146, %p147
      %p149 = scmp.ne.s32.totalorder %s140, %s141
      %p150 = scmp.eq.s32.totalorder %s32, 0
      %p151 = por %p149, %p150
      %p152 = scmp.ne.s32.totalorder %s140, %s141
      %p153 = scmp.eq.s32.totalorder %s33, 1
      %p154 = por %p152, %p153
      %p156 = scmp.ne.s32.totalorder %s141, %s155
      %p157 = scmp.eq.s32.totalorder %s33, 0
      %p158 = por %p156, %p157
      %s160 = sadd.s32 %s159, 1
      %p163 = scmp.eq.s32.totalorder %s27, 1
      %p164 = scmp.ne.s32.totalorder %s159, %s161
      %p165 = scmp.eq.s32.totalorder %s27, 0
      %p166 = por %p164, %p165
      %p167 = scmp.ne.s32.totalorder %s159, %s161
      %p168 = scmp.eq.s32.totalorder %s32, 1
      %p169 = por %p167, %p168
      %p170 = scmp.ne.s32.totalorder %s161, %s162
      %p171 = scmp.eq.s32.totalorder %s32, 0
      %p172 = por %p170, %p171
      %p173 = scmp.ne.s32.totalorder %s161, %s162
      %p174 = scmp.eq.s32.totalorder %s33, 1
      %p175 = por %p173, %p174
      %p177 = scmp.ne.s32.totalorder %s162, %s176
      %p178 = scmp.eq.s32.totalorder %s33, 0
      %p179 = por %p177, %p178
      %s181 = sadd.s32 %s180, 1
      %p184 = scmp.eq.s32.totalorder %s27, 1
      %p185 = scmp.ne.s32.totalorder %s180, %s182
      %p186 = scmp.eq.s32.totalorder %s27, 0
      %p187 = por %p185, %p186
      %p188 = scmp.ne.s32.totalorder %s180, %s182
      %p189 = scmp.eq.s32.totalorder %s32, 1
      %p190 = por %p188, %p189
      %p191 = scmp.ne.s32.totalorder %s182, %s183
      %p192 = scmp.eq.s32.totalorder %s32, 0
      %p193 = por %p191, %p192
      %p194 = scmp.ne.s32.totalorder %s182, %s183
      %p195 = scmp.eq.s32.totalorder %s33, 1
      %p196 = por %p194, %p195
      %p198 = scmp.ne.s32.totalorder %s183, %s197
      %p199 = scmp.eq.s32.totalorder %s33, 0
      %p200 = por %p198, %p199
      %s201 = ssub.s32 %s34, %s46
      %s202 = ssub.s32 %s35, %s42
      %s203 = sor.u32 %s201, %s202
      %p204 = scmp.eq.s32.totalorder %s203, 0
      %s206 = sadd.s32 %s205, 1
      %s207 = scalar_select %p204, %s205, %s206
      %p210 = pneg %p204
      %p211 = scmp.eq.s32.totalorder %s27, 1
      %p212 = por %p210, %p211
      %p213 = scmp.ne.s32.totalorder %s205, %s208
      %p214 = scmp.eq.s32.totalorder %s27, 0
      %p215 = por %p213, %p214
      %p216 = scmp.ne.s32.totalorder %s205, %s208
      %p217 = scmp.eq.s32.totalorder %s32, 1
      %p218 = por %p216, %p217
      %p219 = scmp.ne.s32.totalorder %s208, %s209
      %p220 = scmp.eq.s32.totalorder %s32, 0
      %p221 = por %p219, %p220
      %p222 = scmp.ne.s32.totalorder %s208, %s209
      %p223 = scmp.eq.s32.totalorder %s33, 1
      %p224 = por %p222, %p223
      %p226 = scmp.ne.s32.totalorder %s209, %s225
      %p227 = scmp.eq.s32.totalorder %s33, 0
      %p228 = por %p226, %p227
      %s229 = ssub.s32 %s34, %s46
      %s230 = ssub.s32 %s35, %s42
      %s231 = sor.u32 %s229, %s230
      %p232 = scmp.eq.s32.totalorder %s231, 0
      %s234 = sadd.s32 %s233, 1
      %s235 = scalar_select %p232, %s233, %s234
      %p238 = pneg %p232
      %p239 = scmp.eq.s32.totalorder %s27, 1
      %p240 = por %p238, %p239
      %p241 = scmp.ne.s32.totalorder %s233, %s236
      %p242 = scmp.eq.s32.totalorder %s27, 0
      %p243 = por %p241, %p242
      %p244 = scmp.ne.s32.totalorder %s233, %s236
      %p245 = scmp.eq.s32.totalorder %s32, 1
      %p246 = por %p244, %p245
      %p247 = scmp.ne.s32.totalorder %s236, %s237
      %p248 = scmp.eq.s32.totalorder %s32, 0
      %p249 = por %p247, %p248
      %p250 = scmp.ne.s32.totalorder %s236, %s237
      %p251 = scmp.eq.s32.totalorder %s33, 1
      %p252 = por %p250, %p251
      %p254 = scmp.ne.s32.totalorder %s237, %s253
      %p255 = scmp.eq.s32.totalorder %s33, 0
      %p256 = por %p254, %p255
      %s257 = ssub.s32 %s34, %s46
      %s258 = ssub.s32 %s35, %s42
      %s259 = sor.u32 %s257, %s258
      %p260 = scmp.eq.s32.totalorder %s259, 0
      %s262 = sadd.s32 %s261, 1
      %s263 = scalar_select %p260, %s261, %s262
      %p266 = pneg %p260
      %p267 = scmp.eq.s32.totalorder %s27, 1
      %p268 = por %p266, %p267
      %p269 = scmp.ne.s32.totalorder %s261, %s264
      %p270 = scmp.eq.s32.totalorder %s27, 0
      %p271 = por %p269, %p270
      %p272 = scmp.ne.s32.totalorder %s261, %s264
      %p273 = scmp.eq.s32.totalorder %s32, 1
      %p274 = por %p272, %p273
      %p275 = scmp.ne.s32.totalorder %s264, %s265
      %p276 = scmp.eq.s32.totalorder %s32, 0
      %p277 = por %p275, %p276
      %p278 = scmp.ne.s32.totalorder %s264, %s265
      %p279 = scmp.eq.s32.totalorder %s33, 1
      %p280 = por %p278, %p279
      %p282 = scmp.ne.s32.totalorder %s265, %s281
      %p283 = scmp.eq.s32.totalorder %s33, 0
      %p284 = por %p282, %p283
      %p285 = scmp.le.s32.totalorder 1, %s27
      %p286 = scmp.lt.s32.totalorder %s27, 3
      %p287 = pnand %p285, %p286
      %p288 = pneg %p287
      // Predicated region
      $region9: #{tpu_custom_call.1} parent=5 // pred_check
        _
      $region10: #{tpu_custom_call.1} parent=5 // pred_check_branch
        %290 = sbr.rel (%p287) target = $region12
      $region11: #{tpu_custom_call.1} parent=5 // pred_region
        %s291 = ssub.s32 %s27, 1
        // Predicated region
        $region13: #{tpu_custom_call.1} parent=11 // pred_check
          %p292 = pneg %p88
        $region14: #{tpu_custom_call.1} parent=11 // pred_check_branch
          %294 = sbr.rel (%p292) target = $region16
        $region15: #{tpu_custom_call.1} parent=11 // pred_region
          %s296 = ssub.s32 256, 256
          %297 = vsyncadd [#allocation6], %s296
          %s298 = sshll.u32 [#allocation5], 4
          %s299 = int_to_ptr.vmem [resolvable:$true] %s298
          %304 = dma.hbm_to_vmem [thread:$0]  %s1, 256, %s299, [#allocation6], 64, 64, 4
        $region16: #{tpu_custom_call.1} parent=11 // pred_fallthru
          _
        // Predicated region
        $region17: #{tpu_custom_call.1} parent=11 // pred_check
          %p305 = pneg %p109
        $region18: #{tpu_custom_call.1} parent=11 // pred_check_branch
          %307 = sbr.rel (%p305) target = $region20
        $region19: #{tpu_custom_call.1} parent=11 // pred_region
          %s309 = ssub.s32 256, 256
          %310 = vsyncadd [#allocation6], %s309
          %s311 = sshll.u32 [#allocation7], 4
          %s312 = int_to_ptr.vmem [resolvable:$true] %s311
          %317 = dma.hbm_to_vmem [thread:$0]  %s2, 256, %s312, [#allocation6], 64, 64, 4
        $region20: #{tpu_custom_call.1} parent=11 // pred_fallthru
          _
        // Predicated region
        $region21: #{tpu_custom_call.1} parent=11 // pred_check
          %p318 = pneg %p130
        $region22: #{tpu_custom_call.1} parent=11 // pred_check_branch
          %320 = sbr.rel (%p318) target = $region24
        $region23: #{tpu_custom_call.1} parent=11 // pred_region
          %s322 = ssub.s32 256, 256
          %323 = vsyncadd [#allocation9], %s322
          %s324 = sshll.u32 [#allocation8], 4
          %s325 = int_to_ptr.vmem [resolvable:$true] %s324
          %330 = dma.hbm_to_vmem [thread:$0]  %s3, 256, %s325, [#allocation9], 64, 64, 4
        $region24: #{tpu_custom_call.1} parent=11 // pred_fallthru
          _
        // Predicated region
        $region25: #{tpu_custom_call.1} parent=11 // pred_check
          %p331 = pneg %p151
        $region26: #{tpu_custom_call.1} parent=11 // pred_check_branch
          %333 = sbr.rel (%p331) target = $region28
        $region27: #{tpu_custom_call.1} parent=11 // pred_region
          _
        $region28: #{tpu_custom_call.1} parent=11 // pred_fallthru
          _
        // Predicated region
        $region29: #{tpu_custom_call.1} parent=11 // pred_check
          %p334 = pneg %p172
        $region30: #{tpu_custom_call.1} parent=11 // pred_check_branch
          %336 = sbr.rel (%p334) target = $region32
        $region31: #{tpu_custom_call.1} parent=11 // pred_region
          _
        $region32: #{tpu_custom_call.1} parent=11 // pred_fallthru
          _
        // Predicated region
        $region33: #{tpu_custom_call.1} parent=11 // pred_check
          %p337 = pneg %p193
        $region34: #{tpu_custom_call.1} parent=11 // pred_check_branch
          %339 = sbr.rel (%p337) target = $region36
        $region35: #{tpu_custom_call.1} parent=11 // pred_region
          _
        $region36: #{tpu_custom_call.1} parent=11 // pred_fallthru
          _
      $region12: #{tpu_custom_call.1} parent=5 // pred_fallthru
        _
      %p340 = scmp.lt.s32.totalorder %s27, 2
      // Predicated region
      $region37: #{tpu_custom_call.1} parent=5 // pred_check
        %p341 = pneg %p340
      $region38: #{tpu_custom_call.1} parent=5 // pred_check_branch
        %343 = sbr.rel (%p341) target = $region40
      $region39: #{tpu_custom_call.1} parent=5 // pred_region
        // Predicated region
        $region41: #{tpu_custom_call.1} parent=39 // pred_check
          %p344 = pneg %p61
        $region42: #{tpu_custom_call.1} parent=39 // pred_check_branch
          %346 = sbr.rel (%p344) target = $region44
        $region43: #{tpu_custom_call.1} parent=39 // pred_region
          %s347 = sand.u32 %s51, 1
          %s348 = scalar_lea.sflag [#allocation3], %s347
          %s349 = sand.u32 %s51, 1
          %s350 = smul.addr %s349, 4
          %s351 = scalar_lea.vmem [#allocation2], %s350
          %s353 = ssub.s32 64, 64
          %354 = vsyncadd %s348, %s353
          %s355 = sadd.s32 %s35, %s34
          %s356 = smul.addr %s355, 64
          %s357 = scalar_lea.hbm %s0, %s356
          %s359 = sshll.u32 %s351, 4
          %s360 = int_to_ptr.vmem [resolvable:$true] %s359
          %362 = dma.hbm_to_vmem [thread:$0]  %s357, 64, %s360, %s348
        $region44: #{tpu_custom_call.1} parent=39 // pred_fallthru
          _
      $region40: #{tpu_custom_call.1} parent=5 // pred_fallthru
        _
      %p363 = scmp.le.s32.totalorder 1, %s27
      %p364 = scmp.lt.s32.totalorder %s27, 3
      %p365 = pnand %p363, %p364
      %p366 = pneg %p365
      // Predicated region
      $region45: #{tpu_custom_call.1} parent=5 // pred_check
        _
      $region46: #{tpu_custom_call.1} parent=5 // pred_check_branch
        %368 = sbr.rel (%p365) target = $region48
      $region47: #{tpu_custom_call.1} parent=5 // pred_region
        %s369 = ssub.s32 %s27, 1
        %s370 = sand.u32 %s54, 1
        %s371 = scalar_lea.sflag [#allocation3], %s370
        %s372 = sand.u32 %s54, 1
        %s373 = smul.addr %s372, 4
        %s374 = scalar_lea.vmem [#allocation2], %s373
        // Predicated region
        $region49: #{tpu_custom_call.1} parent=47 // pred_check
          %p375 = pneg %p67
        $region50: #{tpu_custom_call.1} parent=47 // pred_check_branch
          %377 = sbr.rel (%p375) target = $region52
        $region51: #{tpu_custom_call.1} parent=47 // pred_region
          %378 = dma.done %s371, 64
        $region52: #{tpu_custom_call.1} parent=47 // pred_fallthru
          _
        // Predicated region
        $region53: #{tpu_custom_call.1} parent=47 // pred_check
          %p379 = pneg %p88
        $region54: #{tpu_custom_call.1} parent=47 // pred_check_branch
          %381 = sbr.rel (%p379) target = $region56
        $region55: #{tpu_custom_call.1} parent=47 // pred_region
          %382 = dma.done [#allocation6], 256
        $region56: #{tpu_custom_call.1} parent=47 // pred_fallthru
          _
        // Predicated region
        $region57: #{tpu_custom_call.1} parent=47 // pred_check
          %p383 = pneg %p109
        $region58: #{tpu_custom_call.1} parent=47 // pred_check_branch
          %385 = sbr.rel (%p383) target = $region60
        $region59: #{tpu_custom_call.1} parent=47 // pred_region
          %386 = dma.done [#allocation6], 256
        $region60: #{tpu_custom_call.1} parent=47 // pred_fallthru
          _
        // Predicated region
        $region61: #{tpu_custom_call.1} parent=47 // pred_check
          %p387 = pneg %p130
        $region62: #{tpu_custom_call.1} parent=47 // pred_check_branch
          %389 = sbr.rel (%p387) target = $region64
        $region63: #{tpu_custom_call.1} parent=47 // pred_region
          %390 = dma.done [#allocation9], 256
        $region64: #{tpu_custom_call.1} parent=47 // pred_fallthru
          _
        %s391 = sand.u32 %s54, 1
        %s392 = scalar_lea.sflag [#allocation3], %s391
        %s393 = sand.u32 %s54, 1
        %s394 = smul.addr %s393, 4
        %s395 = scalar_lea.vmem [#allocation2], %s394
        %p396 = pneg %p67
        %p397 = pneg %p64
        %p398 = pneg %p88
        %p399 = pneg %p85
        %p400 = pneg %p109
        %p401 = pneg %p106
        %p402 = pneg %p130
        %p403 = pneg %p127
        %p404 = pneg %p151
        %p405 = pneg %p148
        %p406 = pneg %p172
        %p407 = pneg %p169
        %p408 = pneg %p193
        %p409 = pneg %p190
        %p410 = pneg %p221
        %p411 = pneg %p218
        %s412 = sand.u32 %s208, 1
        %s413 = scalar_lea.sflag [#allocation4], %s412
        %s414 = sand.u32 %s208, 1
        %s415 = smul.addr %s414, 4
        %s416 = scalar_lea.vmem [#allocation10], %s415
        %p417 = pneg %p249
        %p418 = pneg %p246
        %s419 = sand.u32 %s32, 1
        %s420 = scalar_lea.sflag [#allocation12], %s419
        %s421 = sand.u32 %s236, 1
        %s422 = smul.addr %s421, 4
        %s423 = scalar_lea.vmem [#allocation11], %s422
        %p424 = pneg %p277
        %p425 = pneg %p274
        %s426 = sand.u32 %s32, 1
        %s427 = scalar_lea.sflag [#allocation12], %s426
        %s428 = sand.u32 %s264, 1
        %s429 = smul.addr %s428, 4
        %s430 = scalar_lea.vmem [#allocation13], %s429
        %v432 = vld [vmem:[%s374] sm:$0xf]
        %v433 = vld [vmem:[#allocation5] sm:$0xf]
        %v434 = vld [vmem:[#allocation5 + $0x4] sm:$0xf]
        %v435 = vld [vmem:[#allocation5 + $0x8] sm:$0xf]
        %v436 = vld [vmem:[#allocation5 + $0xc] sm:$0xf]
        %v437 = vld [vmem:[%s4] sm:$0x1]
        %v439 = vlaneseq
        %v440 = vshrl.u32 %v439, 7
        %v441 = vsub.s32 0, %v440
        %v442 = vrot.slane %v437, %v441
        %v448 = vunpack.c.l.b16 %v433
        %v449 = vunpack.c.l.b16 %v434
        %v450 = vunpack.c.l.b16 %v435
        %v451 = vunpack.c.l.b16 %v436
        %v452 = vpack.c.b16 %v449, %v448
        %v453 = vpack.c.b16 %v451, %v450
        %vm456 = vcmask 261120
        %v458 = vsel %vm456, %v432, 0
        %460 = vmatprep.subr.bf16.mxu0 0
        %461 = vmatpush1.bf16.msra.mxu0 %v452
        %462 = vmatprep.subr.bf16.mxu0 0
        %463 = vmatpush1.bf16.msra.mxu0 %v453
        %464 = vmatprep.subr.bf16.mxu0 0
        %465 = vmatpush1.bf16.msra.mxu0 0
        %466 = vmatprep.subr.bf16.mxu0 0
        %467 = vmatpush1.bf16.msra.mxu0 0
        %468 = vmatprep.subr.bf16.mxu0 0
        %469 = vmatpush1.bf16.msra.mxu0 0
        %470 = vmatprep.subr.bf16.mxu0 0
        %471 = vmatpush1.bf16.msra.mxu0 0
        %472 = vmatprep.subr.bf16.mxu0 0
        %473 = vmatpush1.bf16.msra.mxu0 0
        %474 = vmatprep.subr.bf16.mxu0 0
        %475 = vmatpush1.bf16.msra.mxu0 0
        %476 = vmatprep.subr.bf16.mxu0 0
        %477 = vmatpush1.bf16.msra.mxu0 0
        %478 = vmatprep.subr.bf16.mxu0 0
        %479 = vmatpush1.bf16.msra.mxu0 0
        %480 = vmatprep.subr.bf16.mxu0 0
        %481 = vmatpush1.bf16.msra.mxu0 0
        %482 = vmatprep.subr.bf16.mxu0 0
        %483 = vmatpush1.bf16.msra.mxu0 0
        %484 = vmatprep.subr.bf16.mxu0 0
        %485 = vmatpush1.bf16.msra.mxu0 0
        %486 = vmatprep.subr.bf16.mxu0 0
        %487 = vmatpush1.bf16.msra.mxu0 0
        %488 = vmatprep.subr.bf16.mxu0 0
        %489 = vmatpush1.bf16.msra.mxu0 0
        %490 = vmatprep.subr.bf16.mxu0 0
        %491 = vmatpush1.bf16.msra.mxu0 0
        %492 = vmatprep.mubr.bf16.mxu0 0
        %493 = vmatmul.mubr.bf16.gmra.mrb[0].mxu0 %v458
        %v494 = vpop.f32.mrb[0].mxu0
        %v495 = vadd.f32 %v442, %v494
        %v496 = vpop.f32.mrb[0].mxu0
        %v497 = vpop.f32.mrb[0].mxu0
        %v498 = vpop.f32.mrb[0].mxu0
        %499 = vdwg.mxu0
        %v500 = vpack.c.bf16 %v495, %v495
        %vm501 = vcmask 257024
        %502 = vst.msk [vmem:[%s416] sm:$0xf] %vm501, %v500
        %v503 = vld [vmem:[#allocation7] sm:$0xf]
        %v504 = vld [vmem:[#allocation7 + $0x4] sm:$0xf]
        %v505 = vld [vmem:[#allocation7 + $0x8] sm:$0xf]
        %v506 = vld [vmem:[#allocation7 + $0xc] sm:$0xf]
        %v507 = vld [vmem:[%s5] sm:$0x1]
        %v509 = vlaneseq
        %v510 = vshrl.u32 %v509, 7
        %v511 = vsub.s32 0, %v510
        %v512 = vrot.slane %v507, %v511
        %v518 = vunpack.c.l.b16 %v503
        %v519 = vunpack.c.l.b16 %v504
        %v520 = vunpack.c.l.b16 %v505
        %v521 = vunpack.c.l.b16 %v506
        %v522 = vpack.c.b16 %v519, %v518
        %v523 = vpack.c.b16 %v521, %v520
        %526 = vmatprep.subr.bf16.mxu0 0
        %527 = vmatpush1.bf16.msra.mxu0 %v522
        %528 = vmatprep.subr.bf16.mxu0 0
        %529 = vmatpush1.bf16.msra.mxu0 %v523
        %530 = vmatprep.subr.bf16.mxu0 0
        %531 = vmatpush1.bf16.msra.mxu0 0
        %532 = vmatprep.subr.bf16.mxu0 0
        %533 = vmatpush1.bf16.msra.mxu0 0
        %534 = vmatprep.subr.bf16.mxu0 0
        %535 = vmatpush1.bf16.msra.mxu0 0
        %536 = vmatprep.subr.bf16.mxu0 0
        %537 = vmatpush1.bf16.msra.mxu0 0
        %538 = vmatprep.subr.bf16.mxu0 0
        %539 = vmatpush1.bf16.msra.mxu0 0
        %540 = vmatprep.subr.bf16.mxu0 0
        %541 = vmatpush1.bf16.msra.mxu0 0
        %542 = vmatprep.subr.bf16.mxu0 0
        %543 = vmatpush1.bf16.msra.mxu0 0
        %544 = vmatprep.subr.bf16.mxu0 0
        %545 = vmatpush1.bf16.msra.mxu0 0
        %546 = vmatprep.subr.bf16.mxu0 0
        %547 = vmatpush1.bf16.msra.mxu0 0
        %548 = vmatprep.subr.bf16.mxu0 0
        %549 = vmatpush1.bf16.msra.mxu0 0
        %550 = vmatprep.subr.bf16.mxu0 0
        %551 = vmatpush1.bf16.msra.mxu0 0
        %552 = vmatprep.subr.bf16.mxu0 0
        %553 = vmatpush1.bf16.msra.mxu0 0
        %554 = vmatprep.subr.bf16.mxu0 0
        %555 = vmatpush1.bf16.msra.mxu0 0
        %556 = vmatprep.subr.bf16.mxu0 0
        %557 = vmatpush1.bf16.msra.mxu0 0
        %558 = vmatprep.mubr.bf16.mxu0 0
        %559 = vmatmul.mubr.bf16.gmra.mrb[0].mxu0 %v458
        %v560 = vpop.f32.mrb[0].mxu0
        %v561 = vadd.f32 %v512, %v560
        %v562 = vpop.f32.mrb[0].mxu0
        %v563 = vpop.f32.mrb[0].mxu0
        %v564 = vpop.f32.mrb[0].mxu0
        %565 = vdwg.mxu0
        %v566 = vpack.c.bf16 %v561, %v561
        %567 = vst.msk [vmem:[%s423] sm:$0xf] %vm501, %v566
        %v568 = vld [vmem:[#allocation8] sm:$0xf]
        %v569 = vld [vmem:[#allocation8 + $0x4] sm:$0xf]
        %v570 = vld [vmem:[#allocation8 + $0x8] sm:$0xf]
        %v571 = vld [vmem:[#allocation8 + $0xc] sm:$0xf]
        %v572 = vld [vmem:[%s6] sm:$0x1]
        %v574 = vlaneseq
        %v575 = vshrl.u32 %v574, 7
        %v576 = vsub.s32 0, %v575
        %v577 = vrot.slane %v572, %v576
        %v583 = vunpack.c.l.b16 %v568
        %v584 = vunpack.c.l.b16 %v569
        %v585 = vunpack.c.l.b16 %v570
        %v586 = vunpack.c.l.b16 %v571
        %v587 = vpack.c.b16 %v584, %v583
        %v588 = vpack.c.b16 %v586, %v585
        %591 = vmatprep.subr.bf16.mxu0 0
        %592 = vmatpush1.bf16.msra.mxu0 %v587
        %593 = vmatprep.subr.bf16.mxu0 0
        %594 = vmatpush1.bf16.msra.mxu0 %v588
        %595 = vmatprep.subr.bf16.mxu0 0
        %596 = vmatpush1.bf16.msra.mxu0 0
        %597 = vmatprep.subr.bf16.mxu0 0
        %598 = vmatpush1.bf16.msra.mxu0 0
        %599 = vmatprep.subr.bf16.mxu0 0
        %600 = vmatpush1.bf16.msra.mxu0 0
        %601 = vmatprep.subr.bf16.mxu0 0
        %602 = vmatpush1.bf16.msra.mxu0 0
        %603 = vmatprep.subr.bf16.mxu0 0
        %604 = vmatpush1.bf16.msra.mxu0 0
        %605 = vmatprep.subr.bf16.mxu0 0
        %606 = vmatpush1.bf16.msra.mxu0 0
        %607 = vmatprep.subr.bf16.mxu0 0
        %608 = vmatpush1.bf16.msra.mxu0 0
        %609 = vmatprep.subr.bf16.mxu0 0
        %610 = vmatpush1.bf16.msra.mxu0 0
        %611 = vmatprep.subr.bf16.mxu0 0
        %612 = vmatpush1.bf16.msra.mxu0 0
        %613 = vmatprep.subr.bf16.mxu0 0
        %614 = vmatpush1.bf16.msra.mxu0 0
        %615 = vmatprep.subr.bf16.mxu0 0
        %616 = vmatpush1.bf16.msra.mxu0 0
        %617 = vmatprep.subr.bf16.mxu0 0
        %618 = vmatpush1.bf16.msra.mxu0 0
        %619 = vmatprep.subr.bf16.mxu0 0
        %620 = vmatpush1.bf16.msra.mxu0 0
        %621 = vmatprep.subr.bf16.mxu0 0
        %622 = vmatpush1.bf16.msra.mxu0 0
        %623 = vmatprep.mubr.bf16.mxu0 0
        %624 = vmatmul.mubr.bf16.gmra.mrb[0].mxu0 %v458
        %v625 = vpop.f32.mrb[0].mxu0
        %v626 = vadd.f32 %v577, %v625
        %v627 = vpop.f32.mrb[0].mxu0
        %v628 = vpop.f32.mrb[0].mxu0
        %v629 = vpop.f32.mrb[0].mxu0
        %630 = vdwg.mxu0
        %v631 = vpack.c.bf16 %v626, %v626
        %632 = vst.msk [vmem:[%s430] sm:$0xf] %vm501, %v631
        %s633 = sand.u32 %s208, 1
        %s634 = scalar_lea.sflag [#allocation4], %s633
        %s635 = sand.u32 %s208, 1
        %s636 = smul.addr %s635, 4
        %s637 = scalar_lea.vmem [#allocation10], %s636
        %s638 = sand.u32 %s32, 1
        %s639 = scalar_lea.sflag [#allocation12], %s638
        %s640 = sand.u32 %s236, 1
        %s641 = smul.addr %s640, 4
        %s642 = scalar_lea.vmem [#allocation11], %s641
        %s643 = sand.u32 %s32, 1
        %s644 = scalar_lea.sflag [#allocation12], %s643
        %s645 = sand.u32 %s264, 1
        %s646 = smul.addr %s645, 4
        %s647 = scalar_lea.vmem [#allocation13], %s646
        // Predicated region
        $region65: #{tpu_custom_call.1} parent=47 // pred_check
          %p648 = pneg %p218
        $region66: #{tpu_custom_call.1} parent=47 // pred_check_branch
          %650 = sbr.rel (%p648) target = $region68
        $region67: #{tpu_custom_call.1} parent=47 // pred_region
          %s652 = ssub.s32 64, 64
          %653 = vsyncadd %s634, %s652
          %s654 = sadd.s32 %s37, %s36
          %s655 = smul.addr %s654, 64
          %s656 = scalar_lea.hbm %s7, %s655
          %s658 = sshll.u32 %s637, 4
          %s659 = int_to_ptr.vmem [resolvable:$true] %s658
          %661 = dma.vmem_to_hbm [thread:$0]  %s659, 64, %s656, %s634
        $region68: #{tpu_custom_call.1} parent=47 // pred_fallthru
          _
        // Predicated region
        $region69: #{tpu_custom_call.1} parent=47 // pred_check
          %p662 = pneg %p246
        $region70: #{tpu_custom_call.1} parent=47 // pred_check_branch
          %664 = sbr.rel (%p662) target = $region72
        $region71: #{tpu_custom_call.1} parent=47 // pred_region
          %s666 = ssub.s32 64, 64
          %667 = vsyncadd %s639, %s666
          %s668 = sadd.s32 %s37, %s36
          %s669 = smul.addr %s668, 64
          %s670 = scalar_lea.hbm %s8, %s669
          %s672 = sshll.u32 %s642, 4
          %s673 = int_to_ptr.vmem [resolvable:$true] %s672
          %675 = dma.vmem_to_hbm [thread:$0]  %s673, 64, %s670, %s639
        $region72: #{tpu_custom_call.1} parent=47 // pred_fallthru
          _
        // Predicated region
        $region73: #{tpu_custom_call.1} parent=47 // pred_check
          %p676 = pneg %p274
        $region74: #{tpu_custom_call.1} parent=47 // pred_check_branch
          %678 = sbr.rel (%p676) target = $region76
        $region75: #{tpu_custom_call.1} parent=47 // pred_region
          %s680 = ssub.s32 64, 64
          %681 = vsyncadd %s644, %s680
          %s682 = sadd.s32 %s37, %s36
          %s683 = smul.addr %s682, 64
          %s684 = scalar_lea.hbm %s9, %s683
          %s686 = sshll.u32 %s647, 4
          %s687 = int_to_ptr.vmem [resolvable:$true] %s686
          %689 = dma.vmem_to_hbm [thread:$0]  %s687, 64, %s684, %s644
        $region76: #{tpu_custom_call.1} parent=47 // pred_fallthru
          _
      $region48: #{tpu_custom_call.1} parent=5 // pred_fallthru
        _
      %p690 = scmp.le.s32.totalorder 2, %s27
      // Predicated region
      $region77: #{tpu_custom_call.1} parent=5 // pred_check
        %p691 = pneg %p690
      $region78: #{tpu_custom_call.1} parent=5 // pred_check_branch
        %693 = sbr.rel (%p691) target = $region80
      $region79: #{tpu_custom_call.1} parent=5 // pred_region
        %s694 = ssub.s32 %s27, 2
        // Predicated region
        $region81: #{tpu_custom_call.1} parent=79 // pred_check
          %p695 = pneg %p224
        $region82: #{tpu_custom_call.1} parent=79 // pred_check_branch
          %697 = sbr.rel (%p695) target = $region84
        $region83: #{tpu_custom_call.1} parent=79 // pred_region
          %s698 = sand.u32 %s209, 1
          %s699 = scalar_lea.sflag [#allocation4], %s698
          %s700 = sand.u32 %s209, 1
          %s701 = smul.addr %s700, 4
          %s702 = scalar_lea.vmem [#allocation10], %s701
          %703 = dma.done %s699, 64
        $region84: #{tpu_custom_call.1} parent=79 // pred_fallthru
          _
        // Predicated region
        $region85: #{tpu_custom_call.1} parent=79 // pred_check
          %p704 = pneg %p252
        $region86: #{tpu_custom_call.1} parent=79 // pred_check_branch
          %706 = sbr.rel (%p704) target = $region88
        $region87: #{tpu_custom_call.1} parent=79 // pred_region
          %s707 = sand.u32 %s33, 1
          %s708 = scalar_lea.sflag [#allocation12], %s707
          %s709 = sand.u32 %s237, 1
          %s710 = smul.addr %s709, 4
          %s711 = scalar_lea.vmem [#allocation11], %s710
          %712 = dma.done %s708, 64
        $region88: #{tpu_custom_call.1} parent=79 // pred_fallthru
          _
        // Predicated region
        $region89: #{tpu_custom_call.1} parent=79 // pred_check
          %p713 = pneg %p280
        $region90: #{tpu_custom_call.1} parent=79 // pred_check_branch
          %715 = sbr.rel (%p713) target = $region92
        $region91: #{tpu_custom_call.1} parent=79 // pred_region
          %s716 = sand.u32 %s33, 1
          %s717 = scalar_lea.sflag [#allocation12], %s716
          %s718 = sand.u32 %s265, 1
          %s719 = smul.addr %s718, 4
          %s720 = scalar_lea.vmem [#allocation13], %s719
          %721 = dma.done %s717, 64
        $region92: #{tpu_custom_call.1} parent=79 // pred_fallthru
          _
      $region80: #{tpu_custom_call.1} parent=5 // pred_fallthru
        _
    $region6: #{tpu_custom_call.1} parent=1 // loop_footer
      %s31 = sadd.s32 1, %s27
    $region7: #{tpu_custom_call.1} parent=1 // loop_footer_branch
      %26 = sbr.rel target = $region3
    $region8: #{tpu_custom_call.1} parent=1 // loop_exit
      _
    %722 = vsyncpa [#allocation3], 1
    %s723 = scalar_lea.sflag [#allocation3], 1
    %724 = vsyncpa %s723, 1
    %725 = vsyncpa [#allocation6], 1
    %726 = vsyncpa [#allocation9], 1
    %727 = vsyncpa [#allocation4], 1
    %s728 = scalar_lea.sflag [#allocation4], 1
    %729 = vsyncpa %s728, 1
    %730 = vsyncpa [#allocation12], 1
    %s731 = scalar_lea.sflag [#allocation12], 1
    %732 = vsyncpa %s731, 1

</llo_original>
